<compile_context>
chip_gen: v7x
topology: tpu7x:2x2x1
jax: 0.10.0
libtpu: 0.0.40
codegen_flags: <defaults>
</compile_context>

<pallas_src>
import functools
import math

import jax
import jax.numpy as jnp
from jax import lax
from jax.experimental import pallas as pl
from jax.experimental.pallas import tpu as pltpu

LANE = 128  # TPU lane width; hidden/output buffers are LANE wide.


def _round_up(a, m):
    return ((a + m - 1) // m) * m


def actor_critic_kernel(
    x_ref,          # (TM, K_pad)  f32 states (batch-padded only, narrow K)
    w1_ref, b1_ref, # (K_pad, LANE) bf16, (1, LANE) f32
    w2_ref, b2_ref, # (LANE, LANE)  bf16, (1, LANE) f32
    wh_ref, bh_ref, # fused head:   (LANE, LANE) bf16, (1, LANE) f32
    out_ref,        # (TM, LANE)   f32 packed [mu | sigma | value | 0-pad]
    *,
    n_actions,
):
    # layer1 + ReLU: narrow-K matmul, bf16 operands, f32 accumulation.
    x = x_ref[...].astype(jnp.bfloat16)
    h1 = jnp.dot(x, w1_ref[...], preferred_element_type=jnp.float32) + b1_ref[...]
    h1 = jnp.maximum(h1, 0.0)

    # layer2 + ReLU
    h2 = jnp.dot(h1.astype(jnp.bfloat16), w2_ref[...],
                 preferred_element_type=jnp.float32) + b2_ref[...]
    h2 = jnp.maximum(h2, 0.0)

    # fused head: cols [0:na]   = layer3 logits (mu branch),
    #             cols [na:2na] = layer3 logits (sigma branch),
    #             col  [2na]    = value,  remaining cols = 0.
    head = jnp.dot(h2.astype(jnp.bfloat16), wh_ref[...],
                   preferred_element_type=jnp.float32) + bh_ref[...]

    na = n_actions
    # Column masks built once at (1, LANE); broadcasting handles (TM, LANE).
    col = lax.broadcasted_iota(jnp.int32, (1, LANE), 1)
    is_mu = col < na
    is_sig = (col >= na) & (col < 2 * na)
    is_val = col == 2 * na

    # sigma = softmax(logits, -1) + 1e-5 over the sigma columns only.
    # Exact division (no approx reciprocal) -> sigma rows sum to 1.
    s = jnp.where(is_sig, head, -1e30)
    m = jnp.max(s, axis=-1, keepdims=True)
    e = jnp.exp(s - m)                          # exactly zero on non-sigma cols
    denom = jnp.sum(e, axis=-1, keepdims=True)
    sigma = e / denom + 1e-5

    # Single full-width (lane-dense) store of the packed output slab.
    out_ref[...] = jnp.where(
        is_mu, jnp.maximum(head, 0.0),
        jnp.where(is_sig, sigma,
                  jnp.where(is_val, head, 0.0)))


def pack_params(params, lane=LANE):
    """One-time packing (call at init, NOT per forward): zero-pad weights to
    lane-dense blocks, fuse the actor + value heads into one weight/bias, and
    cast matmul weights to bf16 (biases stay f32). Zero padding keeps math exact."""
    bf16, f32 = jnp.bfloat16, jnp.float32
    n_states, n_hidden = params["w1"].shape
    na = params["w3"].shape[1]
    k_pad = _round_up(n_states, 16)          # one bf16 native tile along K
    assert n_hidden <= lane and 2 * na + 1 <= lane and k_pad <= lane

    w1p = jnp.zeros((k_pad, lane), f32).at[:n_states, :n_hidden].set(
        params["w1"]).astype(bf16)
    b1p = jnp.zeros((1, lane), f32).at[:, :n_hidden].set(params["b1"])
    w2p = jnp.zeros((lane, lane), f32).at[:n_hidden, :n_hidden].set(
        params["w2"]).astype(bf16)
    b2p = jnp.zeros((1, lane), f32).at[:, :n_hidden].set(params["b2"])

    whp = jnp.zeros((lane, lane), f32)
    whp = whp.at[:n_hidden, 0:na].set(params["w3"])          # mu branch
    whp = whp.at[:n_hidden, na:2 * na].set(params["w3"])     # sigma branch (shared layer3)
    whp = whp.at[:n_hidden, 2 * na].set(params["wv"][:, 0])  # value column
    whp = whp.astype(bf16)
    bhp = jnp.zeros((1, lane), f32)
    bhp = bhp.at[:, 0:na].set(params["b3"])
    bhp = bhp.at[:, na:2 * na].set(params["b3"])
    bhp = bhp.at[:, 2 * na].set(params["bv"][0, 0])

    packed = (w1p, b1p, w2p, b2p, whp, bhp)
    meta = {"n_states": n_states, "k_pad": k_pad, "n_actions": na}
    return packed, meta


@functools.partial(jax.jit, static_argnums=(2, 3, 4, 5))
def _forward_jit(x, packed, n_states, k_pad, n_actions, tm):
    w1p, b1p, w2p, b2p, whp, bhp = packed
    B = x.shape[0]
    na = n_actions

    # Big batch tiles amortize the ~0.35us per-grid-step overhead; clamp so the
    # grid keeps >= 2 tiles (both v7x TensorCores) and stays a sublane multiple.
    tm_eff = max(8, min(tm, _round_up(pl.cdiv(B, 2), 8)))
    b_pad = _round_up(B, tm_eff)

    # Pad the batch dim only; lanes stay at k_pad (narrow-K first matmul).
    x_pad = jnp.zeros((b_pad, k_pad), jnp.float32).at[:B, :n_states].set(x)

    kernel = functools.partial(actor_critic_kernel, n_actions=na)
    resident = lambda shape: pl.BlockSpec(shape, lambda i: (0, 0))  # weights stay in VMEM

    out = pl.pallas_call(
        kernel,
        out_shape=jax.ShapeDtypeStruct((b_pad, LANE), jnp.float32),
        grid=(b_pad // tm_eff,),
        in_specs=[
            pl.BlockSpec((tm_eff, k_pad), lambda i: (i, 0)),  # x tiles stream over batch
            resident((k_pad, LANE)), resident((1, LANE)),
            resident((LANE, LANE)), resident((1, LANE)),
            resident((LANE, LANE)), resident((1, LANE)),
        ],
        out_specs=pl.BlockSpec((tm_eff, LANE), lambda i: (i, 0)),
        compiler_params=pltpu.CompilerParams(
            dimension_semantics=("parallel",)),  # shard batch tiles across TCs (v7x)
    )(x_pad, w1p, b1p, w2p, b2p, whp, bhp)

    # Unpack the lane-dense slab (fused into this jit; free layout plumbing).
    mu = out[:B, :na]
    sigma = out[:B, na:2 * na]
    value = out[:B, 2 * na:2 * na + 1]
    return mu, sigma, value


def actor_critic_forward(x, packed, meta, *, tm=512):
    """x: (B, nStates) float32; packed/meta from pack_params (computed once).
    Returns (mu, sigma, value) -- the Normal(mu, sigma) params and critic value."""
    return _forward_jit(x, packed, meta["n_states"], meta["k_pad"],
                        meta["n_actions"], tm)


def init_params(key, n_states, n_actions, n_hidden=16):
    """Deterministic init mimicking PyTorch nn.Linear default (uniform +/-1/sqrt(fan_in)).
    Weights stored as (in_features, out_features)."""
    def linear(k, fan_in, fan_out):
        kw, kb = jax.random.split(k)
        bound = 1.0 / math.sqrt(fan_in)
        w = jax.random.uniform(kw, (fan_in, fan_out), jnp.float32, -bound, bound)
        b = jax.random.uniform(kb, (1, fan_out), jnp.float32, -bound, bound)
        return w, b

    k1, k2, k3, k4 = jax.random.split(key, 4)
    w1, b1 = linear(k1, n_states, n_hidden)
    w2, b2 = linear(k2, n_hidden, n_hidden)
    w3, b3 = linear(k3, n_hidden, n_actions)
    wv, bv = linear(k4, n_hidden, 1)
    return {"w1": w1, "b1": b1, "w2": w2, "b2": b2,
            "w3": w3, "b3": b3, "wv": wv, "bv": bv}


def reference_forward(x, p):
    h1 = jnp.maximum(x @ p["w1"] + p["b1"], 0.0)
    h2 = jnp.maximum(h1 @ p["w2"] + p["b2"], 0.0)
    logits = h2 @ p["w3"] + p["b3"]
    mu = jnp.maximum(logits, 0.0)
    sigma = jax.nn.softmax(logits, axis=-1) + 1e-5
    value = h2 @ p["wv"] + p["bv"]
    return mu, sigma, value


if __name__ == "__main__":
    n_states, n_actions, n_hidden = 8, 4, 16
    batch = 256   # a rollout of states; tiled over the batch axis

    key = jax.random.PRNGKey(0)
    kx, kp = jax.random.split(key)
    x = jax.random.normal(kx, (batch, n_states), dtype=jnp.float32)
    params = init_params(kp, n_states, n_actions, n_hidden)

    # Pack/pad weights ONCE (not per forward call).
    packed, meta = pack_params(params)
    packed = jax.block_until_ready(packed)

    mu, sigma, value = actor_critic_forward(x, packed, meta, tm=512)
    jax.block_until_ready((mu, sigma, value))

    # sanity check against a pure-f32 JAX reference
    mu_r, sigma_r, value_r = reference_forward(x, params)
    assert mu.shape == (batch, n_actions) and sigma.shape == (batch, n_actions)
    assert value.shape == (batch, 1)
    # bf16 matmul operands (f32 accumulation) -> allow ~1e-2 absolute error.
    assert jnp.allclose(mu, mu_r, atol=2e-2), "mu mismatch"
    assert jnp.allclose(sigma, sigma_r, atol=2e-2), "sigma mismatch"
    assert jnp.allclose(value, value_r, atol=2e-2), "value mismatch"

    print("KERNEL_OK")
</pallas_src>

<mosaic_0001>
module attributes {stable_mosaic.version = 11 : i64} {
  func.func @actor_critic_kernel(%arg0: i32, %arg1: memref<128x16xf32, #tpu.memory_space<vmem>>, %arg2: memref<16x128xbf16, #tpu.memory_space<vmem>>, %arg3: memref<1x128xf32, #tpu.memory_space<vmem>>, %arg4: memref<128x128xbf16, #tpu.memory_space<vmem>>, %arg5: memref<1x128xf32, #tpu.memory_space<vmem>>, %arg6: memref<128x128xbf16, #tpu.memory_space<vmem>>, %arg7: memref<1x128xf32, #tpu.memory_space<vmem>>, %arg8: memref<128x128xf32, #tpu.memory_space<vmem>>) attributes {dimension_semantics = [#tpu.dimension_semantics<parallel>], iteration_bounds = array<i64: 2>, scalar_prefetch = 0 : i64, scratch_operands = 0 : i64, tpu.core_type = #tpu.core_type<tc>, window_params = [{transform_indices = @transform_0, window_bounds = array<i64: 128, 16>}, {pipeline_mode = #tpu.pipeline_mode<synchronous>, transform_indices = @transform_1, window_bounds = array<i64: 16, 128>}, {pipeline_mode = #tpu.pipeline_mode<synchronous>, transform_indices = @transform_2, window_bounds = array<i64: 1, 128>}, {pipeline_mode = #tpu.pipeline_mode<synchronous>, transform_indices = @transform_3, window_bounds = array<i64: 128, 128>}, {pipeline_mode = #tpu.pipeline_mode<synchronous>, transform_indices = @transform_4, window_bounds = array<i64: 1, 128>}, {pipeline_mode = #tpu.pipeline_mode<synchronous>, transform_indices = @transform_5, window_bounds = array<i64: 128, 128>}, {pipeline_mode = #tpu.pipeline_mode<synchronous>, transform_indices = @transform_6, window_bounds = array<i64: 1, 128>}, {transform_indices = @transform_7, window_bounds = array<i64: 128, 128>}]} {
    %c0 = arith.constant 0 : index
    %c0_0 = arith.constant 0 : index
    %0 = vector.load %arg1[%c0, %c0_0] : memref<128x16xf32, #tpu.memory_space<vmem>>, vector<128x16xf32>
    %1 = arith.truncf %0 : vector<128x16xf32> to vector<128x16xbf16>
    %c0_1 = arith.constant 0 : index
    %c0_2 = arith.constant 0 : index
    %2 = vector.load %arg2[%c0_1, %c0_2] : memref<16x128xbf16, #tpu.memory_space<vmem>>, vector<16x128xbf16>
    %cst = arith.constant dense<0.000000e+00> : vector<128x128xf32>
    %3 = tpu.matmul %1, %2, %cst {dimension_numbers = #tpu.dot_dimension_numbers<[1], [0], [0], [1], [0, 0, 1, 1], [], []>} : vector<128x16xbf16>, vector<16x128xbf16>, vector<128x128xf32> -> vector<128x128xf32>
    %c0_3 = arith.constant 0 : index
    %c0_4 = arith.constant 0 : index
    %4 = vector.load %arg3[%c0_3, %c0_4] : memref<1x128xf32, #tpu.memory_space<vmem>>, vector<1x128xf32>
    %5 = vector.broadcast %4 : vector<1x128xf32> to vector<128x128xf32>
    %6 = arith.addf %3, %5 : vector<128x128xf32>
    %cst_5 = arith.constant 0.000000e+00 : f32
    %7 = vector.broadcast %cst_5 : f32 to vector<128x128xf32>
    %8 = arith.maximumf %6, %7 : vector<128x128xf32>
    %9 = arith.truncf %8 : vector<128x128xf32> to vector<128x128xbf16>
    %c0_6 = arith.constant 0 : index
    %c0_7 = arith.constant 0 : index
    %10 = vector.load %arg4[%c0_6, %c0_7] : memref<128x128xbf16, #tpu.memory_space<vmem>>, vector<128x128xbf16>
    %cst_8 = arith.constant dense<0.000000e+00> : vector<128x128xf32>
    %11 = tpu.matmul %9, %10, %cst_8 {dimension_numbers = #tpu.dot_dimension_numbers<[1], [0], [0], [1], [0, 0, 1, 1], [], []>} : vector<128x128xbf16>, vector<128x128xbf16>, vector<128x128xf32> -> vector<128x128xf32>
    %c0_9 = arith.constant 0 : index
    %c0_10 = arith.constant 0 : index
    %12 = vector.load %arg5[%c0_9, %c0_10] : memref<1x128xf32, #tpu.memory_space<vmem>>, vector<1x128xf32>
    %13 = vector.broadcast %12 : vector<1x128xf32> to vector<128x128xf32>
    %14 = arith.addf %11, %13 : vector<128x128xf32>
    %cst_11 = arith.constant 0.000000e+00 : f32
    %15 = vector.broadcast %cst_11 : f32 to vector<128x128xf32>
    %16 = arith.maximumf %14, %15 : vector<128x128xf32>
    %17 = arith.truncf %16 : vector<128x128xf32> to vector<128x128xbf16>
    %c0_12 = arith.constant 0 : index
    %c0_13 = arith.constant 0 : index
    %18 = vector.load %arg6[%c0_12, %c0_13] : memref<128x128xbf16, #tpu.memory_space<vmem>>, vector<128x128xbf16>
    %cst_14 = arith.constant dense<0.000000e+00> : vector<128x128xf32>
    %19 = tpu.matmul %17, %18, %cst_14 {dimension_numbers = #tpu.dot_dimension_numbers<[1], [0], [0], [1], [0, 0, 1, 1], [], []>} : vector<128x128xbf16>, vector<128x128xbf16>, vector<128x128xf32> -> vector<128x128xf32>
    %c0_15 = arith.constant 0 : index
    %c0_16 = arith.constant 0 : index
    %20 = vector.load %arg7[%c0_15, %c0_16] : memref<1x128xf32, #tpu.memory_space<vmem>>, vector<1x128xf32>
    %21 = vector.broadcast %20 : vector<1x128xf32> to vector<128x128xf32>
    %22 = arith.addf %19, %21 : vector<128x128xf32>
    %23 = tpu.iota {dimensions = array<i32: 1>} : vector<1x128xi32>
    %c4_i32 = arith.constant 4 : i32
    %24 = vector.broadcast %c4_i32 : i32 to vector<1x128xi32>
    %25 = arith.cmpi slt, %23, %24 : vector<1x128xi32>
    %c4_i32_17 = arith.constant 4 : i32
    %26 = vector.broadcast %c4_i32_17 : i32 to vector<1x128xi32>
    %27 = arith.cmpi sge, %23, %26 : vector<1x128xi32>
    %c8_i32 = arith.constant 8 : i32
    %28 = vector.broadcast %c8_i32 : i32 to vector<1x128xi32>
    %29 = arith.cmpi slt, %23, %28 : vector<1x128xi32>
    %30 = arith.andi %27, %29 : vector<1x128xi1>
    %c8_i32_18 = arith.constant 8 : i32
    %31 = vector.broadcast %c8_i32_18 : i32 to vector<1x128xi32>
    %32 = arith.cmpi eq, %23, %31 : vector<1x128xi32>
    %cst_19 = arith.constant -1.000000e+30 : f32
    %33 = vector.shape_cast %30 : vector<1x128xi1> to vector<1x128xi1>
    %34 = vector.broadcast %33 : vector<1x128xi1> to vector<128x128xi1>
    %35 = vector.broadcast %cst_19 : f32 to vector<128x128xf32>
    %36 = arith.select %34, %22, %35 : vector<128x128xi1>, vector<128x128xf32>
    %cst_20 = arith.constant dense<0xFF800000> : vector<128xf32>
    %37 = vector.multi_reduction <maximumf>, %36, %cst_20 [1] : vector<128x128xf32> to vector<128xf32>
    %38 = vector.shape_cast %37 : vector<128xf32> to vector<128x1xf32>
    %39 = vector.broadcast %38 : vector<128x1xf32> to vector<128x128xf32>
    %40 = arith.subf %36, %39 : vector<128x128xf32>
    %41 = math.exp %40 : vector<128x128xf32>
    %cst_21 = arith.constant dense<0.000000e+00> : vector<128xf32>
    %42 = vector.multi_reduction <add>, %41, %cst_21 [1] : vector<128x128xf32> to vector<128xf32>
    %43 = vector.shape_cast %42 : vector<128xf32> to vector<128x1xf32>
    %44 = vector.broadcast %43 : vector<128x1xf32> to vector<128x128xf32>
    %45 = arith.divf %41, %44 : vector<128x128xf32>
    %cst_22 = arith.constant 9.99999974E-6 : f32
    %46 = vector.broadcast %cst_22 : f32 to vector<128x128xf32>
    %47 = arith.addf %45, %46 : vector<128x128xf32>
    %cst_23 = arith.constant 0.000000e+00 : f32
    %48 = vector.broadcast %cst_23 : f32 to vector<128x128xf32>
    %49 = arith.maximumf %22, %48 : vector<128x128xf32>
    %cst_24 = arith.constant 0.000000e+00 : f32
    %50 = vector.shape_cast %32 : vector<1x128xi1> to vector<1x128xi1>
    %51 = vector.broadcast %50 : vector<1x128xi1> to vector<128x128xi1>
    %52 = vector.broadcast %cst_24 : f32 to vector<128x128xf32>
    %53 = arith.select %51, %22, %52 : vector<128x128xi1>, vector<128x128xf32>
    %54 = vector.shape_cast %30 : vector<1x128xi1> to vector<1x128xi1>
    %55 = vector.broadcast %54 : vector<1x128xi1> to vector<128x128xi1>
    %56 = arith.select %55, %47, %53 : vector<128x128xi1>, vector<128x128xf32>
    %57 = vector.shape_cast %25 : vector<1x128xi1> to vector<1x128xi1>
    %58 = vector.broadcast %57 : vector<1x128xi1> to vector<128x128xi1>
    %59 = arith.select %58, %49, %56 : vector<128x128xi1>, vector<128x128xf32>
    %c0_25 = arith.constant 0 : index
    %c0_26 = arith.constant 0 : index
    %60 = vector.load %arg8[%c0_25, %c0_26] : memref<128x128xf32, #tpu.memory_space<vmem>>, vector<128x128xf32>
    tpu.vector_store %arg8[%c0_25, %c0_26], %59 {strides = array<i32>} : memref<128x128xf32, #tpu.memory_space<vmem>>, vector<128x128xf32>,
    return
  }
  func.func @transform_0(%arg0: i32) -> (i32, i32) {
    %c0_i32 = arith.constant 0 : i32
    %c0_i32_0 = arith.constant 0 : i32
    return %arg0, %c0_i32 : i32, i32
  }
  func.func @transform_1(%arg0: i32) -> (i32, i32) {
    %c0_i32 = arith.constant 0 : i32
    %c0_i32_0 = arith.constant 0 : i32
    %c0_i32_1 = arith.constant 0 : i32
    return %c0_i32, %c0_i32_0 : i32, i32
  }
  func.func @transform_2(%arg0: i32) -> (i32, i32) {
    %c0_i32 = arith.constant 0 : i32
    %c0_i32_0 = arith.constant 0 : i32
    %c0_i32_1 = arith.constant 0 : i32
    return %c0_i32, %c0_i32_0 : i32, i32
  }
  func.func @transform_3(%arg0: i32) -> (i32, i32) {
    %c0_i32 = arith.constant 0 : i32
    %c0_i32_0 = arith.constant 0 : i32
    %c0_i32_1 = arith.constant 0 : i32
    return %c0_i32, %c0_i32_0 : i32, i32
  }
  func.func @transform_4(%arg0: i32) -> (i32, i32) {
    %c0_i32 = arith.constant 0 : i32
    %c0_i32_0 = arith.constant 0 : i32
    %c0_i32_1 = arith.constant 0 : i32
    return %c0_i32, %c0_i32_0 : i32, i32
  }
  func.func @transform_5(%arg0: i32) -> (i32, i32) {
    %c0_i32 = arith.constant 0 : i32
    %c0_i32_0 = arith.constant 0 : i32
    %c0_i32_1 = arith.constant 0 : i32
    return %c0_i32, %c0_i32_0 : i32, i32
  }
  func.func @transform_6(%arg0: i32) -> (i32, i32) {
    %c0_i32 = arith.constant 0 : i32
    %c0_i32_0 = arith.constant 0 : i32
    %c0_i32_1 = arith.constant 0 : i32
    return %c0_i32, %c0_i32_0 : i32, i32
  }
  func.func @transform_7(%arg0: i32) -> (i32, i32) {
    %c0_i32 = arith.constant 0 : i32
    %c0_i32_0 = arith.constant 0 : i32
    return %arg0, %c0_i32 : i32, i32
  }
}

</mosaic_0001>

<llo_original>
// kernel: _forward_jit.1
$region0: #{_forward_jit.1}
  #allocation0 [shape = 'u32[]', space=smem, size = 0x4, offset = 0x4, fixed_abs, tag = 'smem constant byte address 0x4 - core index']
  #allocation1 [shape = 'u32[144,128]{1,0:T(1,128)}', space=vmem, size = 0x12000, scoped, tag = 'internal scratch']
  %s0 = inlined_call_operand.vmem [shape: f32[256,16], index: 0, kind: input, shape index: {}]
  %s1 = inlined_call_operand.vmem [shape: bf16[16,128], index: 1, kind: input, shape index: {}]
  %s2 = inlined_call_operand.vmem [shape: f32[1,128], index: 2, kind: input, shape index: {}]
  %s3 = inlined_call_operand.vmem [shape: bf16[128,128], index: 3, kind: input, shape index: {}]
  %s4 = inlined_call_operand.vmem [shape: f32[1,128], index: 4, kind: input, shape index: {}]
  %s5 = inlined_call_operand.vmem [shape: bf16[128,128], index: 5, kind: input, shape index: {}]
  %s6 = inlined_call_operand.vmem [shape: f32[1,128], index: 6, kind: input, shape index: {}]
  %s7 = inlined_call_operand.vmem [shape: f32[256,128], index: 7, kind: output, shape index: {}]
  %s8 = sld [smem:[#allocation0]]
  $region61: #{_forward_jit.1} parent=0
    _
  %s10 = ssub.s32 1, %s8
  %s11 = scalar_select 0, %s10, %s8
  loop: start=0, step=1, limit=4
  $region2: #{_forward_jit.1} parent=0 // loop_pre_header
    _
  $region3: #{_forward_jit.1} parent=0 // loop_header
    %s13 = sphi 0, %s17
    %p14 = scmp.ge.s32.totalorder %s13, 4
    %s23 = sphi 0, %s25
    %s26 = sphi 0, %s23
    %s27 = sphi 0, %s26
    %s43 = sphi 0, %s27
    %s47 = sphi 0, %s47
    %s49 = sphi 0, %s47
    %s50 = sphi 0, %s49
    %s64 = sphi 0, %s50
    %s68 = sphi 0, %s68
    %s70 = sphi 0, %s68
    %s71 = sphi 0, %s70
    %s85 = sphi 0, %s71
    %s89 = sphi 0, %s89
    %s91 = sphi 0, %s89
    %s92 = sphi 0, %s91
    %s106 = sphi 0, %s92
    %s110 = sphi 0, %s110
    %s112 = sphi 0, %s110
    %s113 = sphi 0, %s112
    %s127 = sphi 0, %s113
    %s131 = sphi 0, %s131
    %s133 = sphi 0, %s131
    %s134 = sphi 0, %s133
    %s148 = sphi 0, %s134
    %s152 = sphi 0, %s152
    %s154 = sphi 0, %s152
    %s155 = sphi 0, %s154
    %s169 = sphi 0, %s155
    %s175 = sphi 0, %s177
    %s178 = sphi 0, %s175
    %s179 = sphi 0, %s178
    %s195 = sphi 0, %s179
  $region4: #{_forward_jit.1} parent=0 // loop_header_branch
    %16 = sbr.rel (%p14) target = $region8
  $region5: #{_forward_jit.1} parent=0 // loop_body
    %s18 = ssub.s32 %s13, 1
    %s19 = ssub.s32 %s13, 2
    %s20 = sadd.s32 %s13, 1
    %s21 = ssub.s32 %s13, %s20
    %p22 = scmp.eq.s32.totalorder %s21, 0
    %s24 = sadd.s32 %s23, 1
    %s25 = scalar_select %p22, %s23, %s24
    %p28 = pneg %p22
    %p29 = scmp.eq.s32.totalorder %s13, 1
    %p30 = por %p28, %p29
    %p31 = scmp.ne.s32.totalorder %s23, %s26
    %p32 = scmp.eq.s32.totalorder %s13, 0
    %p33 = por %p31, %p32
    %p34 = scmp.ne.s32.totalorder %s23, %s26
    %p35 = scmp.eq.s32.totalorder %s18, 1
    %p36 = por %p34, %p35
    %p37 = scmp.ne.s32.totalorder %s26, %s27
    %p38 = scmp.eq.s32.totalorder %s18, 0
    %p39 = por %p37, %p38
    %p40 = scmp.ne.s32.totalorder %s26, %s27
    %p41 = scmp.eq.s32.totalorder %s19, 1
    %p42 = por %p40, %p41
    %p44 = scmp.ne.s32.totalorder %s27, %s43
    %p45 = scmp.eq.s32.totalorder %s19, 0
    %p46 = por %p44, %p45
    %s48 = sadd.s32 %s47, 1
    %p51 = scmp.eq.s32.totalorder %s13, 1
    %p52 = scmp.ne.s32.totalorder %s47, %s49
    %p53 = scmp.eq.s32.totalorder %s13, 0
    %p54 = por %p52, %p53
    %p55 = scmp.ne.s32.totalorder %s47, %s49
    %p56 = scmp.eq.s32.totalorder %s18, 1
    %p57 = por %p55, %p56
    %p58 = scmp.ne.s32.totalorder %s49, %s50
    %p59 = scmp.eq.s32.totalorder %s18, 0
    %p60 = por %p58, %p59
    %p61 = scmp.ne.s32.totalorder %s49, %s50
    %p62 = scmp.eq.s32.totalorder %s19, 1
    %p63 = por %p61, %p62
    %p65 = scmp.ne.s32.totalorder %s50, %s64
    %p66 = scmp.eq.s32.totalorder %s19, 0
    %p67 = por %p65, %p66
    %s69 = sadd.s32 %s68, 1
    %p72 = scmp.eq.s32.totalorder %s13, 1
    %p73 = scmp.ne.s32.totalorder %s68, %s70
    %p74 = scmp.eq.s32.totalorder %s13, 0
    %p75 = por %p73, %p74
    %p76 = scmp.ne.s32.totalorder %s68, %s70
    %p77 = scmp.eq.s32.totalorder %s18, 1
    %p78 = por %p76, %p77
    %p79 = scmp.ne.s32.totalorder %s70, %s71
    %p80 = scmp.eq.s32.totalorder %s18, 0
    %p81 = por %p79, %p80
    %p82 = scmp.ne.s32.totalorder %s70, %s71
    %p83 = scmp.eq.s32.totalorder %s19, 1
    %p84 = por %p82, %p83
    %p86 = scmp.ne.s32.totalorder %s71, %s85
    %p87 = scmp.eq.s32.totalorder %s19, 0
    %p88 = por %p86, %p87
    %s90 = sadd.s32 %s89, 1
    %p93 = scmp.eq.s32.totalorder %s13, 1
    %p94 = scmp.ne.s32.totalorder %s89, %s91
    %p95 = scmp.eq.s32.totalorder %s13, 0
    %p96 = por %p94, %p95
    %p97 = scmp.ne.s32.totalorder %s89, %s91
    %p98 = scmp.eq.s32.totalorder %s18, 1
    %p99 = por %p97, %p98
    %p100 = scmp.ne.s32.totalorder %s91, %s92
    %p101 = scmp.eq.s32.totalorder %s18, 0
    %p102 = por %p100, %p101
    %p103 = scmp.ne.s32.totalorder %s91, %s92
    %p104 = scmp.eq.s32.totalorder %s19, 1
    %p105 = por %p103, %p104
    %p107 = scmp.ne.s32.totalorder %s92, %s106
    %p108 = scmp.eq.s32.totalorder %s19, 0
    %p109 = por %p107, %p108
    %s111 = sadd.s32 %s110, 1
    %p114 = scmp.eq.s32.totalorder %s13, 1
    %p115 = scmp.ne.s32.totalorder %s110, %s112
    %p116 = scmp.eq.s32.totalorder %s13, 0
    %p117 = por %p115, %p116
    %p118 = scmp.ne.s32.totalorder %s110, %s112
    %p119 = scmp.eq.s32.totalorder %s18, 1
    %p120 = por %p118, %p119
    %p121 = scmp.ne.s32.totalorder %s112, %s113
    %p122 = scmp.eq.s32.totalorder %s18, 0
    %p123 = por %p121, %p122
    %p124 = scmp.ne.s32.totalorder %s112, %s113
    %p125 = scmp.eq.s32.totalorder %s19, 1
    %p126 = por %p124, %p125
    %p128 = scmp.ne.s32.totalorder %s113, %s127
    %p129 = scmp.eq.s32.totalorder %s19, 0
    %p130 = por %p128, %p129
    %s132 = sadd.s32 %s131, 1
    %p135 = scmp.eq.s32.totalorder %s13, 1
    %p136 = scmp.ne.s32.totalorder %s131, %s133
    %p137 = scmp.eq.s32.totalorder %s13, 0
    %p138 = por %p136, %p137
    %p139 = scmp.ne.s32.totalorder %s131, %s133
    %p140 = scmp.eq.s32.totalorder %s18, 1
    %p141 = por %p139, %p140
    %p142 = scmp.ne.s32.totalorder %s133, %s134
    %p143 = scmp.eq.s32.totalorder %s18, 0
    %p144 = por %p142, %p143
    %p145 = scmp.ne.s32.totalorder %s133, %s134
    %p146 = scmp.eq.s32.totalorder %s19, 1
    %p147 = por %p145, %p146
    %p149 = scmp.ne.s32.totalorder %s134, %s148
    %p150 = scmp.eq.s32.totalorder %s19, 0
    %p151 = por %p149, %p150
    %s153 = sadd.s32 %s152, 1
    %p156 = scmp.eq.s32.totalorder %s13, 1
    %p157 = scmp.ne.s32.totalorder %s152, %s154
    %p158 = scmp.eq.s32.totalorder %s13, 0
    %p159 = por %p157, %p158
    %p160 = scmp.ne.s32.totalorder %s152, %s154
    %p161 = scmp.eq.s32.totalorder %s18, 1
    %p162 = por %p160, %p161
    %p163 = scmp.ne.s32.totalorder %s154, %s155
    %p164 = scmp.eq.s32.totalorder %s18, 0
    %p165 = por %p163, %p164
    %p166 = scmp.ne.s32.totalorder %s154, %s155
    %p167 = scmp.eq.s32.totalorder %s19, 1
    %p168 = por %p166, %p167
    %p170 = scmp.ne.s32.totalorder %s155, %s169
    %p171 = scmp.eq.s32.totalorder %s19, 0
    %p172 = por %p170, %p171
    %s173 = ssub.s32 %s13, %s20
    %p174 = scmp.eq.s32.totalorder %s173, 0
    %s176 = sadd.s32 %s175, 1
    %s177 = scalar_select %p174, %s175, %s176
    %p180 = pneg %p174
    %p181 = scmp.eq.s32.totalorder %s13, 1
    %p182 = por %p180, %p181
    %p183 = scmp.ne.s32.totalorder %s175, %s178
    %p184 = scmp.eq.s32.totalorder %s13, 0
    %p185 = por %p183, %p184
    %p186 = scmp.ne.s32.totalorder %s175, %s178
    %p187 = scmp.eq.s32.totalorder %s18, 1
    %p188 = por %p186, %p187
    %p189 = scmp.ne.s32.totalorder %s178, %s179
    %p190 = scmp.eq.s32.totalorder %s18, 0
    %p191 = por %p189, %p190
    %p192 = scmp.ne.s32.totalorder %s178, %s179
    %p193 = scmp.eq.s32.totalorder %s19, 1
    %p194 = por %p192, %p193
    %p196 = scmp.ne.s32.totalorder %s179, %s195
    %p197 = scmp.eq.s32.totalorder %s19, 0
    %p198 = por %p196, %p197
    %p199 = scmp.le.s32.totalorder 1, %s13
    %p200 = scmp.lt.s32.totalorder %s13, 3
    %p201 = pnand %p199, %p200
    %p202 = pneg %p201
    // Predicated region
    $region9: #{_forward_jit.1} parent=5 // pred_check
      _
    $region10: #{_forward_jit.1} parent=5 // pred_check_branch
      %204 = sbr.rel (%p201) target = $region12
    $region11: #{_forward_jit.1} parent=5 // pred_region
      %s205 = ssub.s32 %s13, 1
      // Predicated region
      $region13: #{_forward_jit.1} parent=11 // pred_check
        %p206 = pneg %p60
      $region14: #{_forward_jit.1} parent=11 // pred_check_branch
        %208 = sbr.rel (%p206) target = $region16
      $region15: #{_forward_jit.1} parent=11 // pred_region
        _
      $region16: #{_forward_jit.1} parent=11 // pred_fallthru
        _
      // Predicated region
      $region17: #{_forward_jit.1} parent=11 // pred_check
        %p209 = pneg %p81
      $region18: #{_forward_jit.1} parent=11 // pred_check_branch
        %211 = sbr.rel (%p209) target = $region20
      $region19: #{_forward_jit.1} parent=11 // pred_region
        _
      $region20: #{_forward_jit.1} parent=11 // pred_fallthru
        _
      // Predicated region
      $region21: #{_forward_jit.1} parent=11 // pred_check
        %p212 = pneg %p102
      $region22: #{_forward_jit.1} parent=11 // pred_check_branch
        %214 = sbr.rel (%p212) target = $region24
      $region23: #{_forward_jit.1} parent=11 // pred_region
        _
      $region24: #{_forward_jit.1} parent=11 // pred_fallthru
        _
      // Predicated region
      $region25: #{_forward_jit.1} parent=11 // pred_check
        %p215 = pneg %p123
      $region26: #{_forward_jit.1} parent=11 // pred_check_branch
        %217 = sbr.rel (%p215) target = $region28
      $region27: #{_forward_jit.1} parent=11 // pred_region
        _
      $region28: #{_forward_jit.1} parent=11 // pred_fallthru
        _
      // Predicated region
      $region29: #{_forward_jit.1} parent=11 // pred_check
        %p218 = pneg %p144
      $region30: #{_forward_jit.1} parent=11 // pred_check_branch
        %220 = sbr.rel (%p218) target = $region32
      $region31: #{_forward_jit.1} parent=11 // pred_region
        _
      $region32: #{_forward_jit.1} parent=11 // pred_fallthru
        _
      // Predicated region
      $region33: #{_forward_jit.1} parent=11 // pred_check
        %p221 = pneg %p165
      $region34: #{_forward_jit.1} parent=11 // pred_check_branch
        %223 = sbr.rel (%p221) target = $region36
      $region35: #{_forward_jit.1} parent=11 // pred_region
        _
      $region36: #{_forward_jit.1} parent=11 // pred_fallthru
        _
    $region12: #{_forward_jit.1} parent=5 // pred_fallthru
      _
    %p224 = scmp.lt.s32.totalorder %s13, 2
    // Predicated region
    $region37: #{_forward_jit.1} parent=5 // pred_check
      %p225 = pneg %p224
    $region38: #{_forward_jit.1} parent=5 // pred_check_branch
      %227 = sbr.rel (%p225) target = $region40
    $region39: #{_forward_jit.1} parent=5 // pred_region
      // Predicated region
      $region41: #{_forward_jit.1} parent=39 // pred_check
        %p228 = pneg %p33
      $region42: #{_forward_jit.1} parent=39 // pred_check_branch
        %230 = sbr.rel (%p228) target = $region44
      $region43: #{_forward_jit.1} parent=39 // pred_region
        %s231 = smul.u32 16, %s13
        %p232 = scmp.lt.s32.totalorder %s231, 31
        %s233 = scalar_select %p232, %s231, 31
        %s234 = smul.addr %s233, 8
        %s235 = scalar_lea.vmem %s0, %s234
        %s236 = smul.u32 16, %s13
      $region44: #{_forward_jit.1} parent=39 // pred_fallthru
        _
    $region40: #{_forward_jit.1} parent=5 // pred_fallthru
      _
    %p237 = scmp.le.s32.totalorder 1, %s13
    %p238 = scmp.lt.s32.totalorder %s13, 3
    %p239 = pnand %p237, %p238
    %p240 = pneg %p239
    // Predicated region
    $region45: #{_forward_jit.1} parent=5 // pred_check
      _
    $region46: #{_forward_jit.1} parent=5 // pred_check_branch
      %242 = sbr.rel (%p239) target = $region48
    $region47: #{_forward_jit.1} parent=5 // pred_region
      %s243 = ssub.s32 %s13, 1
      %s244 = smul.u32 16, %s18
      %p245 = scmp.lt.s32.totalorder %s244, 31
      %s246 = scalar_select %p245, %s244, 31
      %s247 = smul.addr %s246, 8
      %s248 = scalar_lea.vmem %s0, %s247
      %p249 = pneg %p39
      %p250 = pneg %p36
      %p251 = pneg %p60
      %p252 = pneg %p57
      %p253 = pneg %p81
      %p254 = pneg %p78
      %p255 = pneg %p102
      %p256 = pneg %p99
      %p257 = pneg %p123
      %p258 = pneg %p120
      %p259 = pneg %p144
      %p260 = pneg %p141
      %p261 = pneg %p165
      %p262 = pneg %p162
      %p263 = pneg %p191
      %p264 = pneg %p188
      %s265 = smul.u32 16, %s18
      %p266 = scmp.lt.s32.totalorder %s265, 31
      %s267 = scalar_select %p266, %s265, 31
      %s268 = smul.addr %s267, 8
      %s269 = scalar_lea.vmem %s7, %s268
      %s270 = smul.u32 16, %s18
      %p271 = scmp.lt.s32.totalorder %s270, 31
      %s272 = scalar_select %p271, %s270, 31
      %s273 = smul.addr %s272, 8
      %s274 = scalar_lea.vmem %s0, %s273
      %s275 = smul.u32 16, %s18
      %s276 = smul.u32 16, %s18
      %p277 = scmp.lt.s32.totalorder %s276, 31
      %s278 = scalar_select %p277, %s276, 31
      %s279 = smul.addr %s278, 8
      %s280 = scalar_lea.vmem %s7, %s279
      %s281 = smul.u32 16, %s18
      %v283 = vld [vmem:[%s274] sm:$0xff]
      %v284 = vld [vmem:[%s274 + $0x8] sm:$0xff]
      %v285 = vld [vmem:[%s274 + $0x10] sm:$0xff]
      %v286 = vld [vmem:[%s274 + $0x18] sm:$0xff]
      %v287 = vld [vmem:[%s274 + $0x20] sm:$0xff]
      %v288 = vld [vmem:[%s274 + $0x28] sm:$0xff]
      %v289 = vld [vmem:[%s274 + $0x30] sm:$0xff]
      %v290 = vld [vmem:[%s274 + $0x38] sm:$0xff]
      %v291 = vld [vmem:[%s274 + $0x40] sm:$0xff]
      %v292 = vld [vmem:[%s274 + $0x48] sm:$0xff]
      %v293 = vld [vmem:[%s274 + $0x50] sm:$0xff]
      %v294 = vld [vmem:[%s274 + $0x58] sm:$0xff]
      %v295 = vld [vmem:[%s274 + $0x60] sm:$0xff]
      %v296 = vld [vmem:[%s274 + $0x68] sm:$0xff]
      %v297 = vld [vmem:[%s274 + $0x70] sm:$0xff]
      %v298 = vld [vmem:[%s274 + $0x78] sm:$0xff]
      %v299 = vpack.c.bf16 %v284, %v283
      %v300 = vpack.c.bf16 %v286, %v285
      %v301 = vpack.c.bf16 %v288, %v287
      %v302 = vpack.c.bf16 %v290, %v289
      %v303 = vpack.c.bf16 %v292, %v291
      %v304 = vpack.c.bf16 %v294, %v293
      %v305 = vpack.c.bf16 %v296, %v295
      %v306 = vpack.c.bf16 %v298, %v297
      %v307 = vld [vmem:[%s1] sm:$0xf]
      %v308 = vld [vmem:[%s1 + $0x4] sm:$0xf]
      %v309 = vld [vmem:[%s2] sm:$0x1]
      %v311 = vlaneseq
      %v312 = vshrl.u32 %v311, 7
      %v313 = vsub.s32 0, %v312
      %v314 = vrot.slane %v309, %v313
      %v318 = vunpack.c.l.b16 %v307
      %v319 = vunpack.c.l.b16 %v308
      %v320 = vpack.c.b16 %v319, %v318
      %vm322 = vcmask 130048
      %v324 = vsel %vm322, %v299, 0
      %v327 = vsel %vm322, %v300, 0
      %v330 = vsel %vm322, %v301, 0
      %v333 = vsel %vm322, %v302, 0
      %v336 = vsel %vm322, %v303, 0
      %v339 = vsel %vm322, %v304, 0
      %v342 = vsel %vm322, %v305, 0
      %v345 = vsel %vm322, %v306, 0
      %347 = vmatprep.subr.bf16.mxu0 0
      %348 = vmatpush1.bf16.msra.mxu0 %v320
      %349 = vmatprep.subr.bf16.mxu0 0
      %350 = vmatpush1.bf16.msra.mxu0 0
      %351 = vmatprep.subr.bf16.mxu0 0
      %352 = vmatpush1.bf16.msra.mxu0 0
      %353 = vmatprep.subr.bf16.mxu0 0
      %354 = vmatpush1.bf16.msra.mxu0 0
      %355 = vmatprep.subr.bf16.mxu0 0
      %356 = vmatpush1.bf16.msra.mxu0 0
      %357 = vmatprep.subr.bf16.mxu0 0
      %358 = vmatpush1.bf16.msra.mxu0 0
      %359 = vmatprep.subr.bf16.mxu0 0
      %360 = vmatpush1.bf16.msra.mxu0 0
      %361 = vmatprep.subr.bf16.mxu0 0
      %362 = vmatpush1.bf16.msra.mxu0 0
      %363 = vmatprep.subr.bf16.mxu0 0
      %364 = vmatpush1.bf16.msra.mxu0 0
      %365 = vmatprep.subr.bf16.mxu0 0
      %366 = vmatpush1.bf16.msra.mxu0 0
      %367 = vmatprep.subr.bf16.mxu0 0
      %368 = vmatpush1.bf16.msra.mxu0 0
      %369 = vmatprep.subr.bf16.mxu0 0
      %370 = vmatpush1.bf16.msra.mxu0 0
      %371 = vmatprep.subr.bf16.mxu0 0
      %372 = vmatpush1.bf16.msra.mxu0 0
      %373 = vmatprep.subr.bf16.mxu0 0
      %374 = vmatpush1.bf16.msra.mxu0 0
      %375 = vmatprep.subr.bf16.mxu0 0
      %376 = vmatpush1.bf16.msra.mxu0 0
      %377 = vmatprep.subr.bf16.mxu0 0
      %378 = vmatpush1.bf16.msra.mxu0 0
      %379 = vmatprep.mubr.bf16.mxu0 0
      %380 = vmatmul.mubr.bf16.gmra.mrb[0].mxu0 %v324
      %v381 = vpop.f32.mrb[0].mxu0
      %v382 = vadd.f32 %v314, %v381
      %v383 = vpop.f32.mrb[0].mxu0
      %v384 = vpop.f32.mrb[0].mxu0
      %v385 = vadd.f32 %v314, %v384
      %v386 = vpop.f32.mrb[0].mxu0
      %387 = vmatprep.mubr.bf16.mxu0 0
      %388 = vmatmul.mubr.bf16.gmra.mrb[0].mxu0 %v327
      %v389 = vpop.f32.mrb[0].mxu0
      %v390 = vadd.f32 %v314, %v389
      %v391 = vpop.f32.mrb[0].mxu0
      %v392 = vpop.f32.mrb[0].mxu0
      %v393 = vadd.f32 %v314, %v392
      %v394 = vpop.f32.mrb[0].mxu0
      %395 = vmatprep.mubr.bf16.mxu0 0
      %396 = vmatmul.mubr.bf16.gmra.mrb[0].mxu0 %v330
      %v397 = vpop.f32.mrb[0].mxu0
      %v398 = vadd.f32 %v314, %v397
      %v399 = vpop.f32.mrb[0].mxu0
      %v400 = vpop.f32.mrb[0].mxu0
      %v401 = vadd.f32 %v314, %v400
      %v402 = vpop.f32.mrb[0].mxu0
      %403 = vmatprep.mubr.bf16.mxu0 0
      %404 = vmatmul.mubr.bf16.gmra.mrb[0].mxu0 %v333
      %v405 = vpop.f32.mrb[0].mxu0
      %v406 = vadd.f32 %v314, %v405
      %v407 = vpop.f32.mrb[0].mxu0
      %v408 = vpop.f32.mrb[0].mxu0
      %v409 = vadd.f32 %v314, %v408
      %v410 = vpop.f32.mrb[0].mxu0
      %411 = vmatprep.mubr.bf16.mxu0 0
      %412 = vmatmul.mubr.bf16.gmra.mrb[0].mxu0 %v336
      %v413 = vpop.f32.mrb[0].mxu0
      %v414 = vadd.f32 %v314, %v413
      %v415 = vpop.f32.mrb[0].mxu0
      %v416 = vpop.f32.mrb[0].mxu0
      %v417 = vadd.f32 %v314, %v416
      %v418 = vpop.f32.mrb[0].mxu0
      %419 = vmatprep.mubr.bf16.mxu0 0
      %420 = vmatmul.mubr.bf16.gmra.mrb[0].mxu0 %v339
      %v421 = vpop.f32.mrb[0].mxu0
      %v422 = vadd.f32 %v314, %v421
      %v423 = vpop.f32.mrb[0].mxu0
      %v424 = vpop.f32.mrb[0].mxu0
      %v425 = vadd.f32 %v314, %v424
      %v426 = vpop.f32.mrb[0].mxu0
      %427 = vmatprep.mubr.bf16.mxu0 0
      %428 = vmatmul.mubr.bf16.gmra.mrb[0].mxu0 %v342
      %v429 = vpop.f32.mrb[0].mxu0
      %v430 = vadd.f32 %v314, %v429
      %v431 = vpop.f32.mrb[0].mxu0
      %v432 = vpop.f32.mrb[0].mxu0
      %v433 = vadd.f32 %v314, %v432
      %v434 = vpop.f32.mrb[0].mxu0
      %435 = vmatprep.mubr.bf16.mxu0 0
      %436 = vmatmul.mubr.bf16.gmra.mrb[0].mxu0 %v345
      %v437 = vpop.f32.mrb[0].mxu0
      %v438 = vadd.f32 %v314, %v437
      %v439 = vpop.f32.mrb[0].mxu0
      %v440 = vpop.f32.mrb[0].mxu0
      %v441 = vadd.f32 %v314, %v440
      %v442 = vpop.f32.mrb[0].mxu0
      %443 = vdwg.mxu0
      %v444 = vmax.f32 %v382, 0.0
      %v445 = vmax.f32 %v385, 0.0
      %v446 = vmax.f32 %v390, 0.0
      %v447 = vmax.f32 %v393, 0.0
      %v448 = vmax.f32 %v398, 0.0
      %v449 = vmax.f32 %v401, 0.0
      %v450 = vmax.f32 %v406, 0.0
      %v451 = vmax.f32 %v409, 0.0
      %v452 = vmax.f32 %v414, 0.0
      %v453 = vmax.f32 %v417, 0.0
      %v454 = vmax.f32 %v422, 0.0
      %v455 = vmax.f32 %v425, 0.0
      %v456 = vmax.f32 %v430, 0.0
      %v457 = vmax.f32 %v433, 0.0
      %v458 = vmax.f32 %v438, 0.0
      %v459 = vmax.f32 %v441, 0.0
      %v460 = vpack.c.bf16 %v445, %v444
      %v461 = vpack.c.bf16 %v447, %v446
      %v462 = vpack.c.bf16 %v449, %v448
      %v463 = vpack.c.bf16 %v451, %v450
      %v464 = vpack.c.bf16 %v453, %v452
      %v465 = vpack.c.bf16 %v455, %v454
      %v466 = vpack.c.bf16 %v457, %v456
      %v467 = vpack.c.bf16 %v459, %v458
      %v468 = vld [vmem:[%s3] sm:$0xf]
      %v469 = vld [vmem:[%s3 + $0x4] sm:$0xf]
      %v470 = vld [vmem:[%s3 + $0x8] sm:$0xf]
      %v471 = vld [vmem:[%s3 + $0xc] sm:$0xf]
      %v472 = vld [vmem:[%s3 + $0x10] sm:$0xf]
      %v473 = vld [vmem:[%s3 + $0x14] sm:$0xf]
      %v474 = vld [vmem:[%s3 + $0x18] sm:$0xf]
      %v475 = vld [vmem:[%s3 + $0x1c] sm:$0xf]
      %v476 = vld [vmem:[%s3 + $0x20] sm:$0xf]
      %v477 = vld [vmem:[%s3 + $0x24] sm:$0xf]
      %v478 = vld [vmem:[%s3 + $0x28] sm:$0xf]
      %v479 = vld [vmem:[%s3 + $0x2c] sm:$0xf]
      %v480 = vld [vmem:[%s3 + $0x30] sm:$0xf]
      %v481 = vld [vmem:[%s3 + $0x34] sm:$0xf]
      %v482 = vld [vmem:[%s3 + $0x38] sm:$0xf]
      %v483 = vld [vmem:[%s3 + $0x3c] sm:$0xf]
      %v484 = vld [vmem:[%s4] sm:$0x1]
      %v486 = vlaneseq
      %v487 = vshrl.u32 %v486, 7
      %v488 = vsub.s32 0, %v487
      %v489 = vrot.slane %v484, %v488
      %v507 = vunpack.c.l.b16 %v468
      %v508 = vunpack.c.l.b16 %v469
      %v509 = vunpack.c.l.b16 %v470
      %v510 = vunpack.c.l.b16 %v471
      %v511 = vunpack.c.l.b16 %v472
      %v512 = vunpack.c.l.b16 %v473
      %v513 = vunpack.c.l.b16 %v474
      %v514 = vunpack.c.l.b16 %v475
      %v515 = vunpack.c.l.b16 %v476
      %v516 = vunpack.c.l.b16 %v477
      %v517 = vunpack.c.l.b16 %v478
      %v518 = vunpack.c.l.b16 %v479
      %v519 = vunpack.c.l.b16 %v480
      %v520 = vunpack.c.l.b16 %v481
      %v521 = vunpack.c.l.b16 %v482
      %v522 = vunpack.c.l.b16 %v483
      %v523 = vpack.c.b16 %v508, %v507
      %v524 = vpack.c.b16 %v510, %v509
      %v525 = vpack.c.b16 %v512, %v511
      %v526 = vpack.c.b16 %v514, %v513
      %v527 = vpack.c.b16 %v516, %v515
      %v528 = vpack.c.b16 %v518, %v517
      %v529 = vpack.c.b16 %v520, %v519
      %v530 = vpack.c.b16 %v522, %v521
      %539 = vmatprep.subr.bf16.mxu0 0
      %540 = vmatpush1.bf16.msra.mxu0 %v523
      %541 = vmatprep.subr.bf16.mxu0 0
      %542 = vmatpush1.bf16.msra.mxu0 %v524
      %543 = vmatprep.subr.bf16.mxu0 0
      %544 = vmatpush1.bf16.msra.mxu0 %v525
      %545 = vmatprep.subr.bf16.mxu0 0
      %546 = vmatpush1.bf16.msra.mxu0 %v526
      %547 = vmatprep.subr.bf16.mxu0 0
      %548 = vmatpush1.bf16.msra.mxu0 %v527
      %549 = vmatprep.subr.bf16.mxu0 0
      %550 = vmatpush1.bf16.msra.mxu0 %v528
      %551 = vmatprep.subr.bf16.mxu0 0
      %552 = vmatpush1.bf16.msra.mxu0 %v529
      %553 = vmatprep.subr.bf16.mxu0 0
      %554 = vmatpush1.bf16.msra.mxu0 %v530
      %555 = vmatprep.subr.bf16.mxu0 0
      %556 = vmatpush1.bf16.msra.mxu0 0
      %557 = vmatprep.subr.bf16.mxu0 0
      %558 = vmatpush1.bf16.msra.mxu0 0
      %559 = vmatprep.subr.bf16.mxu0 0
      %560 = vmatpush1.bf16.msra.mxu0 0
      %561 = vmatprep.subr.bf16.mxu0 0
      %562 = vmatpush1.bf16.msra.mxu0 0
      %563 = vmatprep.subr.bf16.mxu0 0
      %564 = vmatpush1.bf16.msra.mxu0 0
      %565 = vmatprep.subr.bf16.mxu0 0
      %566 = vmatpush1.bf16.msra.mxu0 0
      %567 = vmatprep.subr.bf16.mxu0 0
      %568 = vmatpush1.bf16.msra.mxu0 0
      %569 = vmatprep.subr.bf16.mxu0 0
      %570 = vmatpush1.bf16.msra.mxu0 0
      %571 = vmatprep.mubr.bf16.mxu0 0
      %572 = vmatmul.mubr.bf16.gmra.mrb[0].mxu0 %v460
      %v573 = vpop.f32.mrb[0].mxu0
      %v574 = vadd.f32 %v489, %v573
      %v575 = vpop.f32.mrb[0].mxu0
      %v576 = vpop.f32.mrb[0].mxu0
      %v577 = vadd.f32 %v489, %v576
      %v578 = vpop.f32.mrb[0].mxu0
      %579 = vmatprep.mubr.bf16.mxu0 0
      %580 = vmatmul.mubr.bf16.gmra.mrb[0].mxu0 %v461
      %v581 = vpop.f32.mrb[0].mxu0
      %v582 = vadd.f32 %v489, %v581
      %v583 = vpop.f32.mrb[0].mxu0
      %v584 = vpop.f32.mrb[0].mxu0
      %v585 = vadd.f32 %v489, %v584
      %v586 = vpop.f32.mrb[0].mxu0
      %587 = vmatprep.mubr.bf16.mxu0 0
      %588 = vmatmul.mubr.bf16.gmra.mrb[0].mxu0 %v462
      %v589 = vpop.f32.mrb[0].mxu0
      %v590 = vadd.f32 %v489, %v589
      %v591 = vpop.f32.mrb[0].mxu0
      %v592 = vpop.f32.mrb[0].mxu0
      %v593 = vadd.f32 %v489, %v592
      %v594 = vpop.f32.mrb[0].mxu0
      %595 = vmatprep.mubr.bf16.mxu0 0
      %596 = vmatmul.mubr.bf16.gmra.mrb[0].mxu0 %v463
      %v597 = vpop.f32.mrb[0].mxu0
      %v598 = vadd.f32 %v489, %v597
      %v599 = vpop.f32.mrb[0].mxu0
      %v600 = vpop.f32.mrb[0].mxu0
      %v601 = vadd.f32 %v489, %v600
      %v602 = vpop.f32.mrb[0].mxu0
      %603 = vmatprep.mubr.bf16.mxu0 0
      %604 = vmatmul.mubr.bf16.gmra.mrb[0].mxu0 %v464
      %v605 = vpop.f32.mrb[0].mxu0
      %v606 = vadd.f32 %v489, %v605
      %v607 = vpop.f32.mrb[0].mxu0
      %v608 = vpop.f32.mrb[0].mxu0
      %v609 = vadd.f32 %v489, %v608
      %v610 = vpop.f32.mrb[0].mxu0
      %611 = vmatprep.mubr.bf16.mxu0 0
      %612 = vmatmul.mubr.bf16.gmra.mrb[0].mxu0 %v465
      %v613 = vpop.f32.mrb[0].mxu0
      %v614 = vadd.f32 %v489, %v613
      %v615 = vpop.f32.mrb[0].mxu0
      %v616 = vpop.f32.mrb[0].mxu0
      %v617 = vadd.f32 %v489, %v616
      %v618 = vpop.f32.mrb[0].mxu0
      %619 = vmatprep.mubr.bf16.mxu0 0
      %620 = vmatmul.mubr.bf16.gmra.mrb[0].mxu0 %v466
      %v621 = vpop.f32.mrb[0].mxu0
      %v622 = vadd.f32 %v489, %v621
      %v623 = vpop.f32.mrb[0].mxu0
      %v624 = vpop.f32.mrb[0].mxu0
      %v625 = vadd.f32 %v489, %v624
      %v626 = vpop.f32.mrb[0].mxu0
      %627 = vmatprep.mubr.bf16.mxu0 0
      %628 = vmatmul.mubr.bf16.gmra.mrb[0].mxu0 %v467
      %v629 = vpop.f32.mrb[0].mxu0
      %v630 = vadd.f32 %v489, %v629
      %v631 = vpop.f32.mrb[0].mxu0
      %v632 = vpop.f32.mrb[0].mxu0
      %v633 = vadd.f32 %v489, %v632
      %v634 = vpop.f32.mrb[0].mxu0
      %635 = vdwg.mxu0
      %v636 = vmax.f32 %v574, 0.0
      %v637 = vmax.f32 %v577, 0.0
      %v638 = vmax.f32 %v582, 0.0
      %v639 = vmax.f32 %v585, 0.0
      %v640 = vmax.f32 %v590, 0.0
      %v641 = vmax.f32 %v593, 0.0
      %v642 = vmax.f32 %v598, 0.0
      %v643 = vmax.f32 %v601, 0.0
      %v644 = vmax.f32 %v606, 0.0
      %v645 = vmax.f32 %v609, 0.0
      %v646 = vmax.f32 %v614, 0.0
      %v647 = vmax.f32 %v617, 0.0
      %v648 = vmax.f32 %v622, 0.0
      %v649 = vmax.f32 %v625, 0.0
      %v650 = vmax.f32 %v630, 0.0
      %v651 = vmax.f32 %v633, 0.0
      %v652 = vpack.c.bf16 %v637, %v636
      %v653 = vpack.c.bf16 %v639, %v638
      %v654 = vpack.c.bf16 %v641, %v640
      %v655 = vpack.c.bf16 %v643, %v642
      %v656 = vpack.c.bf16 %v645, %v644
      %v657 = vpack.c.bf16 %v647, %v646
      %v658 = vpack.c.bf16 %v649, %v648
      %v659 = vpack.c.bf16 %v651, %v650
      %v660 = vld [vmem:[%s5] sm:$0xf]
      %v661 = vld [vmem:[%s5 + $0x4] sm:$0xf]
      %v662 = vld [vmem:[%s5 + $0x8] sm:$0xf]
      %v663 = vld [vmem:[%s5 + $0xc] sm:$0xf]
      %v664 = vld [vmem:[%s5 + $0x10] sm:$0xf]
      %v665 = vld [vmem:[%s5 + $0x14] sm:$0xf]
      %v666 = vld [vmem:[%s5 + $0x18] sm:$0xf]
      %v667 = vld [vmem:[%s5 + $0x1c] sm:$0xf]
      %v668 = vld [vmem:[%s5 + $0x20] sm:$0xf]
      %v669 = vld [vmem:[%s5 + $0x24] sm:$0xf]
      %v670 = vld [vmem:[%s5 + $0x28] sm:$0xf]
      %v671 = vld [vmem:[%s5 + $0x2c] sm:$0xf]
      %v672 = vld [vmem:[%s5 + $0x30] sm:$0xf]
      %v673 = vld [vmem:[%s5 + $0x34] sm:$0xf]
      %v674 = vld [vmem:[%s5 + $0x38] sm:$0xf]
      %v675 = vld [vmem:[%s5 + $0x3c] sm:$0xf]
      %v676 = vld [vmem:[%s6] sm:$0x1]
      %v678 = vlaneseq
      %v679 = vshrl.u32 %v678, 7
      %v680 = vsub.s32 0, %v679
      %v681 = vrot.slane %v676, %v680
      %v699 = vunpack.c.l.b16 %v660
      %v700 = vunpack.c.l.b16 %v661
      %v701 = vunpack.c.l.b16 %v662
      %v702 = vunpack.c.l.b16 %v663
      %v703 = vunpack.c.l.b16 %v664
      %v704 = vunpack.c.l.b16 %v665
      %v705 = vunpack.c.l.b16 %v666
      %v706 = vunpack.c.l.b16 %v667
      %v707 = vunpack.c.l.b16 %v668
      %v708 = vunpack.c.l.b16 %v669
      %v709 = vunpack.c.l.b16 %v670
      %v710 = vunpack.c.l.b16 %v671
      %v711 = vunpack.c.l.b16 %v672
      %v712 = vunpack.c.l.b16 %v673
      %v713 = vunpack.c.l.b16 %v674
      %v714 = vunpack.c.l.b16 %v675
      %v715 = vpack.c.b16 %v700, %v699
      %v716 = vpack.c.b16 %v702, %v701
      %v717 = vpack.c.b16 %v704, %v703
      %v718 = vpack.c.b16 %v706, %v705
      %v719 = vpack.c.b16 %v708, %v707
      %v720 = vpack.c.b16 %v710, %v709
      %v721 = vpack.c.b16 %v712, %v711
      %v722 = vpack.c.b16 %v714, %v713
      %731 = vmatprep.subr.bf16.mxu0 0
      %732 = vmatpush1.bf16.msra.mxu0 %v715
      %733 = vmatprep.subr.bf16.mxu0 0
      %734 = vmatpush1.bf16.msra.mxu0 %v716
      %735 = vmatprep.subr.bf16.mxu0 0
      %736 = vmatpush1.bf16.msra.mxu0 %v717
      %737 = vmatprep.subr.bf16.mxu0 0
      %738 = vmatpush1.bf16.msra.mxu0 %v718
      %739 = vmatprep.subr.bf16.mxu0 0
      %740 = vmatpush1.bf16.msra.mxu0 %v719
      %741 = vmatprep.subr.bf16.mxu0 0
      %742 = vmatpush1.bf16.msra.mxu0 %v720
      %743 = vmatprep.subr.bf16.mxu0 0
      %744 = vmatpush1.bf16.msra.mxu0 %v721
      %745 = vmatprep.subr.bf16.mxu0 0
      %746 = vmatpush1.bf16.msra.mxu0 %v722
      %747 = vmatprep.subr.bf16.mxu0 0
      %748 = vmatpush1.bf16.msra.mxu0 0
      %749 = vmatprep.subr.bf16.mxu0 0
      %750 = vmatpush1.bf16.msra.mxu0 0
      %751 = vmatprep.subr.bf16.mxu0 0
      %752 = vmatpush1.bf16.msra.mxu0 0
      %753 = vmatprep.subr.bf16.mxu0 0
      %754 = vmatpush1.bf16.msra.mxu0 0
      %755 = vmatprep.subr.bf16.mxu0 0
      %756 = vmatpush1.bf16.msra.mxu0 0
      %757 = vmatprep.subr.bf16.mxu0 0
      %758 = vmatpush1.bf16.msra.mxu0 0
      %759 = vmatprep.subr.bf16.mxu0 0
      %760 = vmatpush1.bf16.msra.mxu0 0
      %761 = vmatprep.subr.bf16.mxu0 0
      %762 = vmatpush1.bf16.msra.mxu0 0
      %763 = vmatprep.mubr.bf16.mxu0 0
      %764 = vmatmul.mubr.bf16.gmra.mrb[0].mxu0 %v652
      %v765 = vpop.f32.mrb[0].mxu0
      %v766 = vadd.f32 %v681, %v765
      %v767 = vpop.f32.mrb[0].mxu0
      %v768 = vpop.f32.mrb[0].mxu0
      %v769 = vadd.f32 %v681, %v768
      %v770 = vpop.f32.mrb[0].mxu0
      %771 = vmatprep.mubr.bf16.mxu0 0
      %772 = vmatmul.mubr.bf16.gmra.mrb[0].mxu0 %v653
      %v773 = vpop.f32.mrb[0].mxu0
      %v774 = vadd.f32 %v681, %v773
      %v775 = vpop.f32.mrb[0].mxu0
      %v776 = vpop.f32.mrb[0].mxu0
      %v777 = vadd.f32 %v681, %v776
      %v778 = vpop.f32.mrb[0].mxu0
      %779 = vmatprep.mubr.bf16.mxu0 0
      %780 = vmatmul.mubr.bf16.gmra.mrb[0].mxu0 %v654
      %v781 = vpop.f32.mrb[0].mxu0
      %v782 = vadd.f32 %v681, %v781
      %v783 = vpop.f32.mrb[0].mxu0
      %v784 = vpop.f32.mrb[0].mxu0
      %v785 = vadd.f32 %v681, %v784
      %v786 = vpop.f32.mrb[0].mxu0
      %787 = vmatprep.mubr.bf16.mxu0 0
      %788 = vmatmul.mubr.bf16.gmra.mrb[0].mxu0 %v655
      %v789 = vpop.f32.mrb[0].mxu0
      %v790 = vadd.f32 %v681, %v789
      %v791 = vpop.f32.mrb[0].mxu0
      %v792 = vpop.f32.mrb[0].mxu0
      %v793 = vadd.f32 %v681, %v792
      %v794 = vpop.f32.mrb[0].mxu0
      %795 = vmatprep.mubr.bf16.mxu0 0
      %796 = vmatmul.mubr.bf16.gmra.mrb[0].mxu0 %v656
      %v797 = vpop.f32.mrb[0].mxu0
      %v798 = vadd.f32 %v681, %v797
      %v799 = vpop.f32.mrb[0].mxu0
      %v800 = vpop.f32.mrb[0].mxu0
      %v801 = vadd.f32 %v681, %v800
      %v802 = vpop.f32.mrb[0].mxu0
      %803 = vmatprep.mubr.bf16.mxu0 0
      %804 = vmatmul.mubr.bf16.gmra.mrb[0].mxu0 %v657
      %v805 = vpop.f32.mrb[0].mxu0
      %v806 = vadd.f32 %v681, %v805
      %v807 = vpop.f32.mrb[0].mxu0
      %v808 = vpop.f32.mrb[0].mxu0
      %v809 = vadd.f32 %v681, %v808
      %v810 = vpop.f32.mrb[0].mxu0
      %811 = vmatprep.mubr.bf16.mxu0 0
      %812 = vmatmul.mubr.bf16.gmra.mrb[0].mxu0 %v658
      %v813 = vpop.f32.mrb[0].mxu0
      %v814 = vadd.f32 %v681, %v813
      %v815 = vpop.f32.mrb[0].mxu0
      %v816 = vpop.f32.mrb[0].mxu0
      %v817 = vadd.f32 %v681, %v816
      %v818 = vpop.f32.mrb[0].mxu0
      %819 = vmatprep.mubr.bf16.mxu0 0
      %820 = vmatmul.mubr.bf16.gmra.mrb[0].mxu0 %v659
      %v821 = vpop.f32.mrb[0].mxu0
      %v822 = vadd.f32 %v681, %v821
      %v823 = vpop.f32.mrb[0].mxu0
      %v824 = vpop.f32.mrb[0].mxu0
      %v825 = vadd.f32 %v681, %v824
      %v826 = vpop.f32.mrb[0].mxu0
      %827 = vdwg.mxu0
      %v828 = vlaneseq
      %v829 = vand.u32 %v828, 127
      %vm830 = vcmp.lt.s32.totalorder %v829, 4
      %vm831 = vcmp.ge.s32.totalorder %v829, 4
      %vm832 = vcmp.lt.s32.totalorder %v829, 8
      %vm833 = vmand %vm831, %vm832
      %vm834 = vcmp.eq.s32.totalorder %v829, 8
      %v835 = vsel %vm833, 1, 0
      %vm836 = vcmp.eq.s32.totalorder %v835, 1
      %v837 = vsel %vm836, %v766, -1e+30
      %v838 = vsel %vm836, %v769, -1e+30
      %v839 = vsel %vm836, %v774, -1e+30
      %v840 = vsel %vm836, %v777, -1e+30
      %v841 = vsel %vm836, %v782, -1e+30
      %v842 = vsel %vm836, %v785, -1e+30
      %v843 = vsel %vm836, %v790, -1e+30
      %v844 = vsel %vm836, %v793, -1e+30
      %v845 = vsel %vm836, %v798, -1e+30
      %v846 = vsel %vm836, %v801, -1e+30
      %v847 = vsel %vm836, %v806, -1e+30
      %v848 = vsel %vm836, %v809, -1e+30
      %v849 = vsel %vm836, %v814, -1e+30
      %v850 = vsel %vm836, %v817, -1e+30
      %v851 = vsel %vm836, %v822, -1e+30
      %v852 = vsel %vm836, %v825, -1e+30
      %853 = vmax.xlane.f32.xlu0 %v837
      %v854 = vpop.xlane.xlu0 %853
      %855 = vmax.xlane.f32.xlu0 %v838
      %v856 = vpop.xlane.xlu0 %855
      %857 = vmax.xlane.f32.xlu0 %v839
      %v858 = vpop.xlane.xlu0 %857
      %859 = vmax.xlane.f32.xlu0 %v840
      %v860 = vpop.xlane.xlu0 %859
      %861 = vmax.xlane.f32.xlu0 %v841
      %v862 = vpop.xlane.xlu0 %861
      %863 = vmax.xlane.f32.xlu0 %v842
      %v864 = vpop.xlane.xlu0 %863
      %865 = vmax.xlane.f32.xlu0 %v843
      %v866 = vpop.xlane.xlu0 %865
      %867 = vmax.xlane.f32.xlu0 %v844
      %v868 = vpop.xlane.xlu0 %867
      %869 = vmax.xlane.f32.xlu0 %v845
      %v870 = vpop.xlane.xlu0 %869
      %871 = vmax.xlane.f32.xlu0 %v846
      %v872 = vpop.xlane.xlu0 %871
      %873 = vmax.xlane.f32.xlu0 %v847
      %v874 = vpop.xlane.xlu0 %873
      %875 = vmax.xlane.f32.xlu0 %v848
      %v876 = vpop.xlane.xlu0 %875
      %877 = vmax.xlane.f32.xlu0 %v849
      %v878 = vpop.xlane.xlu0 %877
      %879 = vmax.xlane.f32.xlu0 %v850
      %v880 = vpop.xlane.xlu0 %879
      %881 = vmax.xlane.f32.xlu0 %v851
      %v882 = vpop.xlane.xlu0 %881
      %883 = vmax.xlane.f32.xlu0 %v852
      %v884 = vpop.xlane.xlu0 %883
      %v885 = vsub.f32 %v837, %v854
      %v886 = vsub.f32 %v838, %v856
      %v887 = vsub.f32 %v839, %v858
      %v888 = vsub.f32 %v840, %v860
      %v889 = vsub.f32 %v841, %v862
      %v890 = vsub.f32 %v842, %v864
      %v891 = vsub.f32 %v843, %v866
      %v892 = vsub.f32 %v844, %v868
      %v893 = vsub.f32 %v845, %v870
      %v894 = vsub.f32 %v846, %v872
      %v895 = vsub.f32 %v847, %v874
      %v896 = vsub.f32 %v848, %v876
      %v897 = vsub.f32 %v849, %v878
      %v898 = vsub.f32 %v850, %v880
      %v899 = vsub.f32 %v851, %v882
      %v900 = vsub.f32 %v852, %v884
      %v901 = vmul.f32 %v885, 1.442695
      %v902 = vpow.pop %v901
      %v903 = vmul.f32 %v886, 1.442695
      %v904 = vpow.pop %v903
      %v905 = vmul.f32 %v887, 1.442695
      %v906 = vpow.pop %v905
      %v907 = vmul.f32 %v888, 1.442695
      %v908 = vpow.pop %v907
      %v909 = vmul.f32 %v889, 1.442695
      %v910 = vpow.pop %v909
      %v911 = vmul.f32 %v890, 1.442695
      %v912 = vpow.pop %v911
      %v913 = vmul.f32 %v891, 1.442695
      %v914 = vpow.pop %v913
      %v915 = vmul.f32 %v892, 1.442695
      %v916 = vpow.pop %v915
      %v917 = vmul.f32 %v893, 1.442695
      %v918 = vpow.pop %v917
      %v919 = vmul.f32 %v894, 1.442695
      %v920 = vpow.pop %v919
      %v921 = vmul.f32 %v895, 1.442695
      %v922 = vpow.pop %v921
      %v923 = vmul.f32 %v896, 1.442695
      %v924 = vpow.pop %v923
      %v925 = vmul.f32 %v897, 1.442695
      %v926 = vpow.pop %v925
      %v927 = vmul.f32 %v898, 1.442695
      %v928 = vpow.pop %v927
      %v929 = vmul.f32 %v899, 1.442695
      %v930 = vpow.pop %v929
      %v931 = vmul.f32 %v900, 1.442695
      %v932 = vpow.pop %v931
      %933 = vadd.xlane.f32.xlu0 %v902
      %v934 = vpop.xlane.xlu0 %933
      %935 = vadd.xlane.f32.xlu0 %v904
      %v936 = vpop.xlane.xlu0 %935
      %937 = vadd.xlane.f32.xlu0 %v906
      %v938 = vpop.xlane.xlu0 %937
      %939 = vadd.xlane.f32.xlu0 %v908
      %v940 = vpop.xlane.xlu0 %939
      %941 = vadd.xlane.f32.xlu0 %v910
      %v942 = vpop.xlane.xlu0 %941
      %943 = vadd.xlane.f32.xlu0 %v912
      %v944 = vpop.xlane.xlu0 %943
      %945 = vadd.xlane.f32.xlu0 %v914
      %v946 = vpop.xlane.xlu0 %945
      %947 = vadd.xlane.f32.xlu0 %v916
      %v948 = vpop.xlane.xlu0 %947
      %949 = vadd.xlane.f32.xlu0 %v918
      %v950 = vpop.xlane.xlu0 %949
      %951 = vadd.xlane.f32.xlu0 %v920
      %v952 = vpop.xlane.xlu0 %951
      %953 = vadd.xlane.f32.xlu0 %v922
      %v954 = vpop.xlane.xlu0 %953
      %955 = vadd.xlane.f32.xlu0 %v924
      %v956 = vpop.xlane.xlu0 %955
      %957 = vadd.xlane.f32.xlu0 %v926
      %v958 = vpop.xlane.xlu0 %957
      %959 = vadd.xlane.f32.xlu0 %v928
      %v960 = vpop.xlane.xlu0 %959
      %961 = vadd.xlane.f32.xlu0 %v930
      %v962 = vpop.xlane.xlu0 %961
      %963 = vadd.xlane.f32.xlu0 %v932
      %v964 = vpop.xlane.xlu0 %963
      %v965 = vrcp.pop %v934
      %v966 = vmul.f32 %v902, %v965
      %v967 = vrcp.pop %v936
      %v968 = vmul.f32 %v904, %v967
      %v969 = vrcp.pop %v938
      %v970 = vmul.f32 %v906, %v969
      %v971 = vrcp.pop %v940
      %v972 = vmul.f32 %v908, %v971
      %v973 = vrcp.pop %v942
      %v974 = vmul.f32 %v910, %v973
      %v975 = vrcp.pop %v944
      %v976 = vmul.f32 %v912, %v975
      %v977 = vrcp.pop %v946
      %v978 = vmul.f32 %v914, %v977
      %v979 = vrcp.pop %v948
      %v980 = vmul.f32 %v916, %v979
      %v981 = vrcp.pop %v950
      %v982 = vmul.f32 %v918, %v981
      %v983 = vrcp.pop %v952
      %v984 = vmul.f32 %v920, %v983
      %v985 = vrcp.pop %v954
      %v986 = vmul.f32 %v922, %v985
      %v987 = vrcp.pop %v956
      %v988 = vmul.f32 %v924, %v987
      %v989 = vrcp.pop %v958
      %v990 = vmul.f32 %v926, %v989
      %v991 = vrcp.pop %v960
      %v992 = vmul.f32 %v928, %v991
      %v993 = vrcp.pop %v962
      %v994 = vmul.f32 %v930, %v993
      %v995 = vrcp.pop %v964
      %v996 = vmul.f32 %v932, %v995
      %v997 = vadd.f32 %v966, 1e-05
      %v998 = vadd.f32 %v968, 1e-05
      %v999 = vadd.f32 %v970, 1e-05
      %v1000 = vadd.f32 %v972, 1e-05
      %v1001 = vadd.f32 %v974, 1e-05
      %v1002 = vadd.f32 %v976, 1e-05
      %v1003 = vadd.f32 %v978, 1e-05
      %v1004 = vadd.f32 %v980, 1e-05
      %v1005 = vadd.f32 %v982, 1e-05
      %v1006 = vadd.f32 %v984, 1e-05
      %v1007 = vadd.f32 %v986, 1e-05
      %v1008 = vadd.f32 %v988, 1e-05
      %v1009 = vadd.f32 %v990, 1e-05
      %v1010 = vadd.f32 %v992, 1e-05
      %v1011 = vadd.f32 %v994, 1e-05
      %v1012 = vadd.f32 %v996, 1e-05
      %v1013 = vmax.f32 %v766, 0.0
      %v1014 = vmax.f32 %v769, 0.0
      %v1015 = vmax.f32 %v774, 0.0
      %v1016 = vmax.f32 %v777, 0.0
      %v1017 = vmax.f32 %v782, 0.0
      %v1018 = vmax.f32 %v785, 0.0
      %v1019 = vmax.f32 %v790, 0.0
      %v1020 = vmax.f32 %v793, 0.0
      %v1021 = vmax.f32 %v798, 0.0
      %v1022 = vmax.f32 %v801, 0.0
      %v1023 = vmax.f32 %v806, 0.0
      %v1024 = vmax.f32 %v809, 0.0
      %v1025 = vmax.f32 %v814, 0.0
      %v1026 = vmax.f32 %v817, 0.0
      %v1027 = vmax.f32 %v822, 0.0
      %v1028 = vmax.f32 %v825, 0.0
      %v1029 = vsel %vm834, 1, 0
      %vm1030 = vcmp.eq.s32.totalorder %v1029, 1
      %v1031 = vsel %vm1030, %v766, 0.0
      %v1032 = vsel %vm1030, %v769, 0.0
      %v1033 = vsel %vm1030, %v774, 0.0
      %v1034 = vsel %vm1030, %v777, 0.0
      %v1035 = vsel %vm1030, %v782, 0.0
      %v1036 = vsel %vm1030, %v785, 0.0
      %v1037 = vsel %vm1030, %v790, 0.0
      %v1038 = vsel %vm1030, %v793, 0.0
      %v1039 = vsel %vm1030, %v798, 0.0
      %v1040 = vsel %vm1030, %v801, 0.0
      %v1041 = vsel %vm1030, %v806, 0.0
      %v1042 = vsel %vm1030, %v809, 0.0
      %v1043 = vsel %vm1030, %v814, 0.0
      %v1044 = vsel %vm1030, %v817, 0.0
      %v1045 = vsel %vm1030, %v822, 0.0
      %v1046 = vsel %vm1030, %v825, 0.0
      %v1047 = vsel %vm836, %v997, %v1031
      %v1048 = vsel %vm836, %v998, %v1032
      %v1049 = vsel %vm836, %v999, %v1033
      %v1050 = vsel %vm836, %v1000, %v1034
      %v1051 = vsel %vm836, %v1001, %v1035
      %v1052 = vsel %vm836, %v1002, %v1036
      %v1053 = vsel %vm836, %v1003, %v1037
      %v1054 = vsel %vm836, %v1004, %v1038
      %v1055 = vsel %vm836, %v1005, %v1039
      %v1056 = vsel %vm836, %v1006, %v1040
      %v1057 = vsel %vm836, %v1007, %v1041
      %v1058 = vsel %vm836, %v1008, %v1042
      %v1059 = vsel %vm836, %v1009, %v1043
      %v1060 = vsel %vm836, %v1010, %v1044
      %v1061 = vsel %vm836, %v1011, %v1045
      %v1062 = vsel %vm836, %v1012, %v1046
      %v1063 = vsel %vm830, 1, 0
      %vm1064 = vcmp.eq.s32.totalorder %v1063, 1
      %v1065 = vsel %vm1064, %v1013, %v1047
      %v1066 = vsel %vm1064, %v1014, %v1048
      %v1067 = vsel %vm1064, %v1015, %v1049
      %v1068 = vsel %vm1064, %v1016, %v1050
      %v1069 = vsel %vm1064, %v1017, %v1051
      %v1070 = vsel %vm1064, %v1018, %v1052
      %v1071 = vsel %vm1064, %v1019, %v1053
      %v1072 = vsel %vm1064, %v1020, %v1054
      %v1073 = vsel %vm1064, %v1021, %v1055
      %v1074 = vsel %vm1064, %v1022, %v1056
      %v1075 = vsel %vm1064, %v1023, %v1057
      %v1076 = vsel %vm1064, %v1024, %v1058
      %v1077 = vsel %vm1064, %v1025, %v1059
      %v1078 = vsel %vm1064, %v1026, %v1060
      %v1079 = vsel %vm1064, %v1027, %v1061
      %v1080 = vsel %vm1064, %v1028, %v1062
      %1081 = vst [vmem:[%s280] sm:$0xff] %v1065
      %1082 = vst [vmem:[%s280 + $0x8] sm:$0xff] %v1066
      %1083 = vst [vmem:[%s280 + $0x10] sm:$0xff] %v1067
      %1084 = vst [vmem:[%s280 + $0x18] sm:$0xff] %v1068
      %1085 = vst [vmem:[%s280 + $0x20] sm:$0xff] %v1069
      %1086 = vst [vmem:[%s280 + $0x28] sm:$0xff] %v1070
      %1087 = vst [vmem:[%s280 + $0x30] sm:$0xff] %v1071
      %1088 = vst [vmem:[%s280 + $0x38] sm:$0xff] %v1072
      %1089 = vst [vmem:[%s280 + $0x40] sm:$0xff] %v1073
      %1090 = vst [vmem:[%s280 + $0x48] sm:$0xff] %v1074
      %1091 = vst [vmem:[%s280 + $0x50] sm:$0xff] %v1075
      %1092 = vst [vmem:[%s280 + $0x58] sm:$0xff] %v1076
      %1093 = vst [vmem:[%s280 + $0x60] sm:$0xff] %v1077
      %1094 = vst [vmem:[%s280 + $0x68] sm:$0xff] %v1078
      %1095 = vst [vmem:[%s280 + $0x70] sm:$0xff] %v1079
      %1096 = vst [vmem:[%s280 + $0x78] sm:$0xff] %v1080
      %s1097 = smul.u32 16, %s18
      %p1098 = scmp.lt.s32.totalorder %s1097, 31
      %s1099 = scalar_select %p1098, %s1097, 31
      %s1100 = smul.addr %s1099, 8
      %s1101 = scalar_lea.vmem %s7, %s1100
      // Predicated region
      $region49: #{_forward_jit.1} parent=47 // pred_check
        %p1102 = pneg %p188
      $region50: #{_forward_jit.1} parent=47 // pred_check_branch
        %1104 = sbr.rel (%p1102) target = $region52
      $region51: #{_forward_jit.1} parent=47 // pred_region
        %s1105 = smul.u32 16, %s18
      $region52: #{_forward_jit.1} parent=47 // pred_fallthru
        _
    $region48: #{_forward_jit.1} parent=5 // pred_fallthru
      _
    %p1106 = scmp.le.s32.totalorder 2, %s13
    // Predicated region
    $region53: #{_forward_jit.1} parent=5 // pred_check
      %p1107 = pneg %p1106
    $region54: #{_forward_jit.1} parent=5 // pred_check_branch
      %1109 = sbr.rel (%p1107) target = $region56
    $region55: #{_forward_jit.1} parent=5 // pred_region
      %s1110 = ssub.s32 %s13, 2
      // Predicated region
      $region57: #{_forward_jit.1} parent=55 // pred_check
        %p1111 = pneg %p194
      $region58: #{_forward_jit.1} parent=55 // pred_check_branch
        %1113 = sbr.rel (%p1111) target = $region60
      $region59: #{_forward_jit.1} parent=55 // pred_region
        %s1114 = smul.u32 16, %s19
        %p1115 = scmp.lt.s32.totalorder %s1114, 31
        %s1116 = scalar_select %p1115, %s1114, 31
        %s1117 = smul.addr %s1116, 8
        %s1118 = scalar_lea.vmem %s7, %s1117
      $region60: #{_forward_jit.1} parent=55 // pred_fallthru
        _
    $region56: #{_forward_jit.1} parent=5 // pred_fallthru
      _
  $region6: #{_forward_jit.1} parent=0 // loop_footer
    %s17 = sadd.s32 1, %s13
  $region7: #{_forward_jit.1} parent=0 // loop_footer_branch
    %12 = sbr.rel target = $region3
  $region8: #{_forward_jit.1} parent=0 // loop_exit
    _

</llo_original>
